<compile_context>
chip_gen: v7x
topology: tpu7x:2x2x1
jax: 0.10.0
libtpu: 0.0.40
codegen_flags: <defaults>
</compile_context>

<pallas_src>
import jax
import jax.numpy as jnp
from jax.experimental import pallas as pl
from jax.experimental.pallas import tpu as pltpu


def shape_mapping_kernel(x_ref, w1_ref, b1_ref, w2_ref, b2_ref, o_ref):
    # x_ref : (bm, 2)            float32
    # w1_ref: (2, H)   b1_ref: (1, H)
    # w2_ref: (H, Ep)  b2_ref: (1, Ep)     (Ep = embed_dim padded to k*128)
    # o_ref : (bm, Ep)
    x = x_ref[...]
    w1 = w1_ref[...]

    # Layer 1: K=2 contraction on the VPU (broadcast mul-adds), not the MXU.
    h = x[:, 0:1] * w1[0:1, :] + x[:, 1:2] * w1[1:2, :] + b1_ref[...]
    h = jnp.maximum(h, 0.0)                                   # ReLU 1

    # Layer 2: (bm, H) @ (H, Ep) on the MXU with fp32 accumulation.
    y = jnp.dot(h, w2_ref[...], preferred_element_type=jnp.float32) + b2_ref[...]
    o_ref[...] = jnp.maximum(y, 0.0).astype(o_ref.dtype)      # ReLU 2


def shape_mapping(height_width, w1, b1, w2, b2, *, block_b=256):
    """height_width: (B, 2); returns (B, embed_dim) float32."""
    B = height_width.shape[0]
    E = w2.shape[1]

    # Lane-dense output: pad embed dim up to a multiple of 128 so the final
    # store is a full unmasked vst.  Padded columns compute relu(0) = 0 and
    # are sliced off after the call.
    E_pad = -(-E // 128) * 128
    if E_pad != E:
        w2 = jnp.pad(w2, ((0, 0), (0, E_pad - E)))
        b2 = jnp.pad(b2, ((0, 0), (0, E_pad - E)))

    call_kwargs = dict(
        out_shape=jax.ShapeDtypeStruct((B, E_pad), jnp.float32),
    )

    if B > block_b and B % block_b == 0:
        # Tiled path: pipeline batch-row DMA against compute, shard the batch
        # axis across TensorCores.  block_b is a multiple of 8 (sublane rule);
        # the lane dims (2, E_pad) are full-array / 128-multiples.
        call_kwargs.update(
            grid=(B // block_b,),
            in_specs=[
                pl.BlockSpec((block_b, 2), lambda i: (i, 0)),
                pl.BlockSpec(w1.shape, lambda i: (0, 0)),
                pl.BlockSpec(b1.shape, lambda i: (0, 0)),
                pl.BlockSpec(w2.shape, lambda i: (0, 0)),
                pl.BlockSpec(b2.shape, lambda i: (0, 0)),
            ],
            out_specs=pl.BlockSpec((block_b, E_pad), lambda i: (i, 0)),
            compiler_params=pltpu.CompilerParams(
                dimension_semantics=("parallel",)),
        )
    else:
        # Small problem: single grid point, whole arrays resident in VMEM.
        vmem = pl.BlockSpec(memory_space=pltpu.MemorySpace.VMEM)
        call_kwargs.update(
            grid=(),
            in_specs=[vmem, vmem, vmem, vmem, vmem],
            out_specs=vmem,
        )

    out = pl.pallas_call(shape_mapping_kernel, **call_kwargs)(
        height_width, w1, b1, w2, b2)
    return out[:, :E] if E_pad != E else out


def init_params(key, embed_dim):
    """Deterministic init mimicking nn.Linear defaults (uniform +-1/sqrt(fan_in)).

    Weights stored transposed: (in_features, out_features)."""
    hid = embed_dim // 2
    k1, k2, k3, k4 = jax.random.split(key, 4)
    lim1 = 1.0 / jnp.sqrt(2.0)
    lim2 = 1.0 / jnp.sqrt(float(hid))
    w1 = jax.random.uniform(k1, (2, hid), jnp.float32, -lim1, lim1)
    b1 = jax.random.uniform(k2, (1, hid), jnp.float32, -lim1, lim1)
    w2 = jax.random.uniform(k3, (hid, embed_dim), jnp.float32, -lim2, lim2)
    b2 = jax.random.uniform(k4, (1, embed_dim), jnp.float32, -lim2, lim2)
    return w1, b1, w2, b2


if __name__ == "__main__":
    key = jax.random.PRNGKey(0)
    k_in, k_big, k_p = jax.random.split(key, 3)

    embed_dim = 32
    w1, b1, w2, b2 = init_params(k_p, embed_dim)

    def ref_fn(x):
        h = jnp.maximum(
            jnp.dot(x, w1, precision=jax.lax.Precision.HIGHEST) + b1, 0.0)
        return jnp.maximum(
            jnp.dot(h, w2, precision=jax.lax.Precision.HIGHEST) + b2, 0.0)

    # Small batch (module-typical use): single grid point path.
    height_width = jax.random.uniform(k_in, (8, 2), jnp.float32, 0.0, 64.0)
    out_small = jax.block_until_ready(
        shape_mapping(height_width, w1, b1, w2, b2))
    assert out_small.shape == (8, embed_dim)
    assert jnp.allclose(out_small, ref_fn(height_width), atol=1e-3, rtol=1e-5)

    # Larger batch: exercises the tiled / parallel-grid path.
    hw_big = jax.random.uniform(k_big, (1024, 2), jnp.float32, 0.0, 64.0)
    out_big = jax.block_until_ready(shape_mapping(hw_big, w1, b1, w2, b2))
    assert out_big.shape == (1024, embed_dim)
    assert jnp.allclose(out_big, ref_fn(hw_big), atol=1e-3, rtol=1e-5)

    print("KERNEL_OK")
</pallas_src>

<mosaic_0001>
module attributes {stable_mosaic.version = 11 : i64} {
  func.func @shape_mapping_kernel(%arg0: memref<8x2xf32, #tpu.memory_space<vmem>>, %arg1: memref<2x16xf32, #tpu.memory_space<vmem>>, %arg2: memref<1x16xf32, #tpu.memory_space<vmem>>, %arg3: memref<16x128xf32, #tpu.memory_space<vmem>>, %arg4: memref<1x128xf32, #tpu.memory_space<vmem>>, %arg5: memref<8x128xf32, #tpu.memory_space<vmem>>) attributes {dimension_semantics = [], scalar_prefetch = 0 : i64, scratch_operands = 0 : i64, tpu.core_type = #tpu.core_type<tc>} {
    %c0 = arith.constant 0 : index
    %c0_0 = arith.constant 0 : index
    %0 = vector.load %arg0[%c0, %c0_0] : memref<8x2xf32, #tpu.memory_space<vmem>>, vector<8x2xf32>
    %c0_1 = arith.constant 0 : index
    %c0_2 = arith.constant 0 : index
    %1 = vector.load %arg1[%c0_1, %c0_2] : memref<2x16xf32, #tpu.memory_space<vmem>>, vector<2x16xf32>
    %2 = vector.extract_strided_slice %0 {offsets = [0, 0], sizes = [8, 1], strides = [1, 1]} : vector<8x2xf32> to vector<8x1xf32>
    %3 = vector.extract_strided_slice %1 {offsets = [0, 0], sizes = [1, 16], strides = [1, 1]} : vector<2x16xf32> to vector<1x16xf32>
    %4 = vector.broadcast %2 : vector<8x1xf32> to vector<8x16xf32>
    %5 = vector.broadcast %3 : vector<1x16xf32> to vector<8x16xf32>
    %6 = arith.mulf %4, %5 : vector<8x16xf32>
    %7 = vector.extract_strided_slice %0 {offsets = [0, 1], sizes = [8, 1], strides = [1, 1]} : vector<8x2xf32> to vector<8x1xf32>
    %8 = vector.extract_strided_slice %1 {offsets = [1, 0], sizes = [1, 16], strides = [1, 1]} : vector<2x16xf32> to vector<1x16xf32>
    %9 = vector.broadcast %7 : vector<8x1xf32> to vector<8x16xf32>
    %10 = vector.broadcast %8 : vector<1x16xf32> to vector<8x16xf32>
    %11 = arith.mulf %9, %10 : vector<8x16xf32>
    %12 = arith.addf %6, %11 : vector<8x16xf32>
    %c0_3 = arith.constant 0 : index
    %c0_4 = arith.constant 0 : index
    %13 = vector.load %arg2[%c0_3, %c0_4] : memref<1x16xf32, #tpu.memory_space<vmem>>, vector<1x16xf32>
    %14 = vector.broadcast %13 : vector<1x16xf32> to vector<8x16xf32>
    %15 = arith.addf %12, %14 : vector<8x16xf32>
    %cst = arith.constant 0.000000e+00 : f32
    %16 = vector.broadcast %cst : f32 to vector<8x16xf32>
    %17 = arith.maximumf %15, %16 : vector<8x16xf32>
    %c0_5 = arith.constant 0 : index
    %c0_6 = arith.constant 0 : index
    %18 = vector.load %arg3[%c0_5, %c0_6] : memref<16x128xf32, #tpu.memory_space<vmem>>, vector<16x128xf32>
    %cst_7 = arith.constant dense<0.000000e+00> : vector<8x128xf32>
    %19 = tpu.matmul %17, %18, %cst_7 {dimension_numbers = #tpu.dot_dimension_numbers<[1], [0], [0], [1], [0, 0, 1, 1], [], []>} : vector<8x16xf32>, vector<16x128xf32>, vector<8x128xf32> -> vector<8x128xf32>
    %c0_8 = arith.constant 0 : index
    %c0_9 = arith.constant 0 : index
    %20 = vector.load %arg4[%c0_8, %c0_9] : memref<1x128xf32, #tpu.memory_space<vmem>>, vector<1x128xf32>
    %21 = vector.broadcast %20 : vector<1x128xf32> to vector<8x128xf32>
    %22 = arith.addf %19, %21 : vector<8x128xf32>
    %cst_10 = arith.constant 0.000000e+00 : f32
    %23 = vector.broadcast %cst_10 : f32 to vector<8x128xf32>
    %24 = arith.maximumf %22, %23 : vector<8x128xf32>
    %c0_11 = arith.constant 0 : index
    %c0_12 = arith.constant 0 : index
    %25 = vector.load %arg5[%c0_11, %c0_12] : memref<8x128xf32, #tpu.memory_space<vmem>>, vector<8x128xf32>
    tpu.vector_store %arg5[%c0_11, %c0_12], %24 {strides = array<i32>} : memref<8x128xf32, #tpu.memory_space<vmem>>, vector<8x128xf32>,
    return
  }
}

</mosaic_0001>

<llo_original>
// kernel: tpu_custom_call.1
$region0: #{tpu_custom_call.1}
  #allocation0 [shape = 'u32[]', space=smem, size = 0x4, offset = 0x4, fixed_abs, tag = 'smem constant byte address 0x4 - core index']
  #allocation1 [shape = 'u32[144,128]{1,0:T(1,128)}', space=vmem, size = 0x12000, scoped, tag = 'internal scratch']
  %s0 = inlined_call_operand.vmem [shape: f32[8,2], index: 0, kind: input, shape index: {}]
  %s1 = inlined_call_operand.vmem [shape: f32[2,16], index: 1, kind: input, shape index: {}]
  %s2 = inlined_call_operand.vmem [shape: f32[1,16], index: 2, kind: input, shape index: {}]
  %s3 = inlined_call_operand.vmem [shape: f32[16,128], index: 3, kind: input, shape index: {}]
  %s4 = inlined_call_operand.vmem [shape: f32[1,128], index: 4, kind: input, shape index: {}]
  %s5 = inlined_call_operand.hbm [shape: f32[8,128], index: 5, kind: output, shape index: {}]
  %s6 = sld [smem:[#allocation0]]
  $region30: #{tpu_custom_call.1} parent=0
    _
  %s8 = ssub.s32 1, %s6
  %s9 = scalar_select 0, %s8, %s6
  $region1: #{tpu_custom_call.1} parent=0
    #allocation2 [shape = 'u8[4096]{0}', space=vmem, size = 0x1000, scoped, tag = 'output window, operand 0, single buffered']
    #allocation3 [shape = 's32[1]{0}', space=sflag, size = 0x4, scoped, tag = 'scoped memory for tpu_custom_call.1']
    %10 = vsyncpa [#allocation3], 0
    // Predicated region
    $region2: #{tpu_custom_call.1} parent=1 // pred_check
      _
    $region3: #{tpu_custom_call.1} parent=1 // pred_check_branch
      %12 = sbr.rel (0) target = $region5
    $region4: #{tpu_custom_call.1} parent=1 // pred_region
      _
    $region5: #{tpu_custom_call.1} parent=1 // pred_fallthru
      _
    // Predicated region
    $region6: #{tpu_custom_call.1} parent=1 // pred_check
      _
    $region7: #{tpu_custom_call.1} parent=1 // pred_check_branch
      %14 = sbr.rel (0) target = $region9
    $region8: #{tpu_custom_call.1} parent=1 // pred_region
      _
    $region9: #{tpu_custom_call.1} parent=1 // pred_fallthru
      _
    // Predicated region
    $region10: #{tpu_custom_call.1} parent=1 // pred_check
      _
    $region11: #{tpu_custom_call.1} parent=1 // pred_check_branch
      %16 = sbr.rel (0) target = $region13
    $region12: #{tpu_custom_call.1} parent=1 // pred_region
      _
    $region13: #{tpu_custom_call.1} parent=1 // pred_fallthru
      _
    // Predicated region
    $region14: #{tpu_custom_call.1} parent=1 // pred_check
      _
    $region15: #{tpu_custom_call.1} parent=1 // pred_check_branch
      %18 = sbr.rel (0) target = $region17
    $region16: #{tpu_custom_call.1} parent=1 // pred_region
      _
    $region17: #{tpu_custom_call.1} parent=1 // pred_fallthru
      _
    // Predicated region
    $region18: #{tpu_custom_call.1} parent=1 // pred_check
      _
    $region19: #{tpu_custom_call.1} parent=1 // pred_check_branch
      %20 = sbr.rel (0) target = $region21
    $region20: #{tpu_custom_call.1} parent=1 // pred_region
      _
    $region21: #{tpu_custom_call.1} parent=1 // pred_fallthru
      _
    %v21 = vld [vmem:[%s0] sm:$0xff]
    %v22 = vld [vmem:[%s1] sm:$0x3]
    %24 = vset.pattern.permute.xlu0 0
    %25 = vperm.xlu0 %24, %v21
    %v26 = vpop.permute.xlu0 %25
    %v28 = vlaneseq
    %v29 = vshrl.u32 %v28, 7
    %v30 = vsub.s32 0, %v29
    %v31 = vrot.slane %v22, %v30
    %v32 = vmul.f32 %v26, %v31
    %33 = vset.pattern.permute.xlu0 1
    %34 = vperm.xlu0 %33, %v21
    %v35 = vpop.permute.xlu0 %34
    %v37 = vlaneseq
    %v38 = vshrl.u32 %v37, 7
    %v39 = vsub.s32 1, %v38
    %v40 = vrot.slane %v22, %v39
    %v41 = vmul.f32 %v35, %v40
    %v42 = vadd.f32 %v32, %v41
    %v43 = vld [vmem:[%s2] sm:$0x1]
    %v45 = vlaneseq
    %v46 = vshrl.u32 %v45, 7
    %v47 = vsub.s32 0, %v46
    %v48 = vrot.slane %v43, %v47
    %v50 = vadd.f32 %v42, %v48
    %v51 = vmax.f32 %v50, 0.0
    %v52 = vld [vmem:[%s3] sm:$0xff]
    %v53 = vld [vmem:[%s3 + $0x8] sm:$0xff]
    %v54 = vld [vmem:[%s4] sm:$0x1]
    %v56 = vlaneseq
    %v57 = vshrl.u32 %v56, 7
    %v58 = vsub.s32 0, %v57
    %v59 = vrot.slane %v54, %v58
    %vm61 = vcmask 130048
    %v63 = vsel %vm61, %v51, 0
    %65 = vmatprep.subr.mxu0 0.0
    %66 = vmatpush1.msra.mxu0 %v52
    %67 = vmatprep.subr.mxu0 0.0
    %68 = vmatpush1.msra.mxu0 %v53
    %69 = vmatprep.subr.mxu0 0.0
    %70 = vmatpush1.msra.mxu0 0.0
    %71 = vmatprep.subr.mxu0 0.0
    %72 = vmatpush1.msra.mxu0 0.0
    %73 = vmatprep.subr.mxu0 0.0
    %74 = vmatpush1.msra.mxu0 0.0
    %75 = vmatprep.subr.mxu0 0.0
    %76 = vmatpush1.msra.mxu0 0.0
    %77 = vmatprep.subr.mxu0 0.0
    %78 = vmatpush1.msra.mxu0 0.0
    %79 = vmatprep.subr.mxu0 0.0
    %80 = vmatpush1.msra.mxu0 0.0
    %81 = vmatprep.subr.mxu0 0.0
    %82 = vmatpush1.msra.mxu0 0.0
    %83 = vmatprep.subr.mxu0 0.0
    %84 = vmatpush1.msra.mxu0 0.0
    %85 = vmatprep.subr.mxu0 0.0
    %86 = vmatpush1.msra.mxu0 0.0
    %87 = vmatprep.subr.mxu0 0.0
    %88 = vmatpush1.msra.mxu0 0.0
    %89 = vmatprep.subr.mxu0 0.0
    %90 = vmatpush1.msra.mxu0 0.0
    %91 = vmatprep.subr.mxu0 0.0
    %92 = vmatpush1.msra.mxu0 0.0
    %93 = vmatprep.subr.mxu0 0.0
    %94 = vmatpush1.msra.mxu0 0.0
    %95 = vmatprep.subr.mxu0 0.0
    %96 = vmatpush1.msra.mxu0 0.0
    %97 = vmatprep.subr.mxu0 0.0
    %98 = vmatpush1.msra.mxu0 0.0
    %99 = vmatprep.subr.mxu0 0.0
    %100 = vmatpush1.msra.mxu0 0.0
    %101 = vmatprep.subr.mxu0 0.0
    %102 = vmatpush1.msra.mxu0 0.0
    %103 = vmatprep.subr.mxu0 0.0
    %104 = vmatpush1.msra.mxu0 0.0
    %105 = vmatprep.subr.mxu0 0.0
    %106 = vmatpush1.msra.mxu0 0.0
    %107 = vmatprep.subr.mxu0 0.0
    %108 = vmatpush1.msra.mxu0 0.0
    %109 = vmatprep.subr.mxu0 0.0
    %110 = vmatpush1.msra.mxu0 0.0
    %111 = vmatprep.subr.mxu0 0.0
    %112 = vmatpush1.msra.mxu0 0.0
    %113 = vmatprep.subr.mxu0 0.0
    %114 = vmatpush1.msra.mxu0 0.0
    %115 = vmatprep.subr.mxu0 0.0
    %116 = vmatpush1.msra.mxu0 0.0
    %117 = vmatprep.subr.mxu0 0.0
    %118 = vmatpush1.msra.mxu0 0.0
    %119 = vmatprep.subr.mxu0 0.0
    %120 = vmatpush1.msra.mxu0 0.0
    %121 = vmatprep.subr.mxu0 0.0
    %122 = vmatpush1.msra.mxu0 0.0
    %123 = vmatprep.subr.mxu0 0.0
    %124 = vmatpush1.msra.mxu0 0.0
    %125 = vmatprep.subr.mxu0 0.0
    %126 = vmatpush1.msra.mxu0 0.0
    %127 = vmatprep.subr.mxu0 0.0
    %128 = vmatpush1.msra.mxu0 0.0
    %129 = vmatprep.mubr.f32.mxu0 0.0
    %130 = vmatmul.mubr.f32.gmra.mrb[0].mxu0 %v63
    %v131 = vpop.f32.mrb[0].mxu0
    %v132 = vadd.f32 %v59, %v131
    %v133 = vpop.f32.mrb[0].mxu0
    %134 = vdwg.mxu0
    %v135 = vmax.f32 %v132, 0.0
    %136 = vst [vmem:[#allocation2] sm:$0xff] %v135
    // Predicated region
    $region22: #{tpu_custom_call.1} parent=1 // pred_check
      _
    $region23: #{tpu_custom_call.1} parent=1 // pred_check_branch
      %138 = sbr.rel (0) target = $region25
    $region24: #{tpu_custom_call.1} parent=1 // pred_region
      %s140 = ssub.s32 128, 128
      %141 = vsyncadd [#allocation3], %s140
      %s143 = sshll.u32 [#allocation2], 4
      %s144 = int_to_ptr.vmem [resolvable:$true] %s143
      %146 = dma.vmem_to_hbm [thread:$0]  %s144, 128, %s5, [#allocation3]
    $region25: #{tpu_custom_call.1} parent=1 // pred_fallthru
      _
    // Predicated region
    $region26: #{tpu_custom_call.1} parent=1 // pred_check
      _
    $region27: #{tpu_custom_call.1} parent=1 // pred_check_branch
      %148 = sbr.rel (0) target = $region29
    $region28: #{tpu_custom_call.1} parent=1 // pred_region
      %149 = dma.done [#allocation3], 128
    $region29: #{tpu_custom_call.1} parent=1 // pred_fallthru
      _
    %150 = vsyncpa [#allocation3], 1

</llo_original>
